<compile_context>
chip_gen: v5e
topology: v5e:2x2
jax: 0.10.0
libtpu: 0.0.40
codegen_flags: <defaults>
</compile_context>

<pallas_src>
import functools

import jax
import jax.numpy as jnp
from jax.experimental import pallas as pl
from jax.experimental.pallas import tpu as pltpu


# --------------------------------------------------------------------------- #
# Kernels
# --------------------------------------------------------------------------- #
def _encoder_kernel_fused(x_ref, w1_ref, b1_ref, w2_ref, b2_ref, o_ref, *,
                          negative_slope):
    # Single-K fast path: w1 is fully resident, no accumulator scratch needed.
    # x_ref:  [tb, in_p]            w1_ref: [in_p, hidden_p]  b1_ref: [1, hidden_p]
    # w2_ref: [hidden_p, latent_p]  b2_ref: [1, latent_p]     o_ref:  [tb, latent_p]
    h = jnp.dot(x_ref[...], w1_ref[...], preferred_element_type=jnp.float32)
    h = h + b1_ref[...].astype(jnp.float32)
    h = jnp.where(h >= 0, h, negative_slope * h)          # LeakyReLU in f32
    if h.dtype != w2_ref.dtype:                           # trace-time check
        h = h.astype(w2_ref.dtype)
    y = jnp.dot(h, w2_ref[...], preferred_element_type=jnp.float32)
    o_ref[...] = (y + b2_ref[...].astype(jnp.float32)).astype(o_ref.dtype)


def _encoder_kernel_acc(x_ref, w1_ref, b1_ref, w2_ref, b2_ref, o_ref, h_acc, *,
                        negative_slope):
    # K-tiled fallback: accumulate the first matmul over in_features in f32.
    # x_ref:  [tb, tk]              w1_ref: [tk, hidden_p]   b1_ref: [1, hidden_p]
    # w2_ref: [hidden_p, latent_p]  b2_ref: [1, latent_p]
    # o_ref:  [tb, latent_p]        h_acc:  [tb, hidden_p] f32 scratch
    k = pl.program_id(1)

    @pl.when(k == 0)
    def _():
        h_acc[...] = jnp.zeros_like(h_acc)

    h_acc[...] += jnp.dot(x_ref[...], w1_ref[...],
                          preferred_element_type=jnp.float32)

    @pl.when(k == pl.num_programs(1) - 1)
    def _():
        h = h_acc[...] + b1_ref[...].astype(jnp.float32)
        h = jnp.where(h >= 0, h, negative_slope * h)
        if h.dtype != w2_ref.dtype:
            h = h.astype(w2_ref.dtype)
        y = jnp.dot(h, w2_ref[...], preferred_element_type=jnp.float32)
        o_ref[...] = (y + b2_ref[...].astype(jnp.float32)).astype(o_ref.dtype)


# --------------------------------------------------------------------------- #
# Wrapper
# --------------------------------------------------------------------------- #
def _round_up(x, m):
    return (x + m - 1) // m * m


def _pad2d(a, shape):
    if a.shape == shape:
        return a
    return jnp.zeros(shape, a.dtype).at[:a.shape[0], :a.shape[1]].set(a)


def _vmem_capacity_bytes():
    """Physical VMEM per TensorCore; conservative 64 MiB fallback (v7x)."""
    try:
        info = pltpu.get_tpu_info()
        cap = getattr(info, "vmem_capacity_bytes", None)
        if cap:
            return int(cap)
    except Exception:
        pass
    return 64 << 20


def encoder_forward(x, w1, b1, w2, b2, *, negative_slope=0.2, tb=None, tk=None):
    """x: [B, in_features]; w1: [in, hidden]; b1: [hidden]; w2: [hidden, latent]; b2: [latent]."""
    B, in_features = x.shape
    hidden = w1.shape[1]
    latent = w2.shape[1]
    dtype = x.dtype
    xbytes = jnp.dtype(dtype).itemsize
    wbytes = jnp.dtype(w1.dtype).itemsize
    row_align = {4: 8, 2: 16, 1: 32}.get(xbytes, 8)   # sublane packing

    # ---- lane-dense feature padding (multiples of 128) ----
    in_p = _round_up(in_features, 128)
    hid_p = _round_up(hidden, 128)
    lat_p = _round_up(latent, 128)

    # ---- per-generation VMEM budget ----
    vmem_cap = _vmem_capacity_bytes()
    budget = max(vmem_cap - (8 << 20), 16 << 20)      # compiler headroom

    def _fixed_bytes(tk_):
        # weight / bias blocks; Pallas double-buffers every input block
        return 2 * (tk_ * hid_p + hid_p * lat_p + hid_p + lat_p) * wbytes

    def _row_bytes(tk_, tiled_k):
        b = 2 * (tk_ + lat_p) * xbytes                # double-buffered x / out tiles
        b += hid_p * 4                                # f32 hidden activation
        if tiled_k:
            b += hid_p * 4                            # accumulator + temp at final K step
        return b

    # ---- choose single-K (resident w1) vs K-tiled path ----
    force_tiled = tk is not None and tk < in_p
    min_single = _fixed_bytes(in_p) + row_align * _row_bytes(in_p, False)
    single_k = (not force_tiled) and (min_single <= budget)

    if single_k:
        tk_eff = in_p
        in_pk = in_p
        tiled = False
    else:
        tk_eff = 512 if tk is None else tk
        tk_eff = max(128, _round_up(min(tk_eff, in_p), 128))
        while tk_eff > 128 and (_fixed_bytes(tk_eff)
                                + row_align * _row_bytes(tk_eff, True)) > budget:
            tk_eff = max(128, _round_up(tk_eff // 2, 128))
        in_pk = _round_up(in_p, tk_eff)               # K an exact multiple of tk
        tiled = True

    # ---- batch tile: as large as the budget allows, >=2 (and even #) tiles ----
    rb = _row_bytes(tk_eff, tiled)
    avail = budget - _fixed_bytes(tk_eff)
    tb_budget = max(row_align, (avail // rb) // row_align * row_align) if avail > rb else row_align
    if tb is None:
        if B >= 2 * row_align:
            tb_target = _round_up(-(-B // 2), row_align)   # >=2 tiles (v7x megacore)
        else:
            tb_target = _round_up(max(B, 1), row_align)
        tb = max(row_align, min(tb_target, tb_budget, 1024))
    else:
        tb = max(row_align, _round_up(tb, row_align))
    ntiles = -(-B // tb)
    if ntiles > 2 and ntiles % 2 == 1:                # even tile count for 2-TC chips
        tb = max(row_align, _round_up(-(-B // (ntiles + 1)), row_align))
    B_p = _round_up(B, tb)

    # ---- explicit VMEM limit, capped at ~7/8 of the physical capacity ----
    vmem_needed = _fixed_bytes(tk_eff) + tb * rb
    vmem_ceiling = (vmem_cap // 8) * 7                # ~112 MiB on v5e/v6e, ~56 MiB on v7x
    vmem_limit = int(min(max(vmem_needed + (8 << 20), 32 << 20), vmem_ceiling))
    vmem_limit = max(vmem_limit, 16 << 20)

    # ---- zero-pad operands (padded hidden/latent columns stay exactly zero) ----
    x_p = _pad2d(x, (B_p, in_pk))
    w1_p = _pad2d(w1, (in_pk, hid_p))
    b1_p = _pad2d(b1.reshape(1, hidden), (1, hid_p))
    w2_p = _pad2d(w2, (hid_p, lat_p))
    b2_p = _pad2d(b2.reshape(1, latent), (1, lat_p))

    if not tiled:
        # -------- fast path: w1 resident, no scratch, 1-D parallel grid --------
        kernel = functools.partial(_encoder_kernel_fused,
                                   negative_slope=negative_slope)
        out_p = pl.pallas_call(
            kernel,
            out_shape=jax.ShapeDtypeStruct((B_p, lat_p), dtype),
            grid_spec=pltpu.PrefetchScalarGridSpec(
                num_scalar_prefetch=0,
                grid=(B_p // tb,),
                in_specs=[
                    pl.BlockSpec((tb, in_pk), lambda i: (i, 0)),       # x tile
                    pl.BlockSpec((in_pk, hid_p), lambda i: (0, 0)),    # w1 (resident)
                    pl.BlockSpec((1, hid_p), lambda i: (0, 0)),        # b1 (resident)
                    pl.BlockSpec((hid_p, lat_p), lambda i: (0, 0)),    # w2 (resident)
                    pl.BlockSpec((1, lat_p), lambda i: (0, 0)),        # b2 (resident)
                ],
                out_specs=pl.BlockSpec((tb, lat_p), lambda i: (i, 0)),
                scratch_shapes=[],
            ),
            compiler_params=pltpu.CompilerParams(
                dimension_semantics=("parallel",),
                vmem_limit_bytes=vmem_limit,
            ),
        )(x_p, w1_p, b1_p, w2_p, b2_p)
    else:
        # -------- fallback: in_features tiled along trailing K axis --------
        kernel = functools.partial(_encoder_kernel_acc,
                                   negative_slope=negative_slope)
        out_p = pl.pallas_call(
            kernel,
            out_shape=jax.ShapeDtypeStruct((B_p, lat_p), dtype),
            grid_spec=pltpu.PrefetchScalarGridSpec(
                num_scalar_prefetch=0,
                grid=(B_p // tb, in_pk // tk_eff),
                in_specs=[
                    pl.BlockSpec((tb, tk_eff), lambda i, k: (i, k)),     # x tile
                    pl.BlockSpec((tk_eff, hid_p), lambda i, k: (k, 0)),  # w1 K-tile
                    pl.BlockSpec((1, hid_p), lambda i, k: (0, 0)),       # b1 (resident)
                    pl.BlockSpec((hid_p, lat_p), lambda i, k: (0, 0)),   # w2 (resident)
                    pl.BlockSpec((1, lat_p), lambda i, k: (0, 0)),       # b2 (resident)
                ],
                out_specs=pl.BlockSpec((tb, lat_p), lambda i, k: (i, 0)),
                scratch_shapes=[pltpu.VMEM((tb, hid_p), jnp.float32)],
            ),
            compiler_params=pltpu.CompilerParams(
                dimension_semantics=("parallel", "arbitrary"),
                vmem_limit_bytes=vmem_limit,
            ),
        )(x_p, w1_p, b1_p, w2_p, b2_p)

    # Strip batch / lane padding.
    return out_p[:B, :latent]


def encoder_reference(x, w1, b1, w2, b2, negative_slope=0.2):
    h = x @ w1 + b1
    h = jnp.where(h >= 0, h, negative_slope * h)
    return h @ w2 + b2


if __name__ == "__main__":
    key = jax.random.PRNGKey(0)
    B = 8
    in_features = 32
    latent_dim = 16
    hidden = latent_dim * 2
    negative_slope = 0.2

    k_x, k_w1, k_b1, k_w2, k_b2 = jax.random.split(key, 5)

    x = jax.random.normal(k_x, (B, in_features), dtype=jnp.float32)
    # Deterministic init mimicking nn.Linear's uniform(-1/sqrt(fan_in), 1/sqrt(fan_in)).
    lim1 = 1.0 / (in_features ** 0.5)
    lim2 = 1.0 / (hidden ** 0.5)
    w1 = jax.random.uniform(k_w1, (in_features, hidden), jnp.float32, -lim1, lim1)
    b1 = jax.random.uniform(k_b1, (hidden,), jnp.float32, -lim1, lim1)
    w2 = jax.random.uniform(k_w2, (hidden, latent_dim), jnp.float32, -lim2, lim2)
    b2 = jax.random.uniform(k_b2, (latent_dim,), jnp.float32, -lim2, lim2)

    out = encoder_forward(x, w1, b1, w2, b2, negative_slope=negative_slope)
    out = jax.block_until_ready(out)
    ref = encoder_reference(x, w1, b1, w2, b2, negative_slope)
    assert out.shape == (B, latent_dim), out.shape
    assert jnp.allclose(out, ref, atol=1e-5, rtol=1e-5), "mismatch vs reference"

    # Larger, non-aligned shape (exercises batch / lane padding + 2 batch tiles).
    B2, in2, lat2 = 300, 200, 24
    hid2 = lat2 * 2
    xb = jax.random.normal(k_x, (B2, in2), dtype=jnp.float32)
    w1b = jax.random.uniform(k_w1, (in2, hid2), jnp.float32, -0.1, 0.1)
    b1b = jax.random.uniform(k_b1, (hid2,), jnp.float32, -0.1, 0.1)
    w2b = jax.random.uniform(k_w2, (hid2, lat2), jnp.float32, -0.1, 0.1)
    b2b = jax.random.uniform(k_b2, (lat2,), jnp.float32, -0.1, 0.1)
    out2 = jax.block_until_ready(encoder_forward(xb, w1b, b1b, w2b, b2b))
    ref2 = encoder_reference(xb, w1b, b1b, w2b, b2b)
    assert out2.shape == (B2, lat2), out2.shape
    assert jnp.allclose(out2, ref2, atol=1e-4, rtol=1e-4), "mismatch (padded case)"

    # Force the K-tiled fallback path (tk < in_features) to keep it exercised.
    B3, in3, lat3 = 64, 384, 8
    hid3 = lat3 * 2
    xc = jax.random.normal(k_x, (B3, in3), dtype=jnp.float32)
    w1c = jax.random.uniform(k_w1, (in3, hid3), jnp.float32, -0.05, 0.05)
    b1c = jax.random.uniform(k_b1, (hid3,), jnp.float32, -0.05, 0.05)
    w2c = jax.random.uniform(k_w2, (hid3, lat3), jnp.float32, -0.05, 0.05)
    b2c = jax.random.uniform(k_b2, (lat3,), jnp.float32, -0.05, 0.05)
    out3 = jax.block_until_ready(encoder_forward(xc, w1c, b1c, w2c, b2c, tk=128))
    ref3 = encoder_reference(xc, w1c, b1c, w2c, b2c)
    assert out3.shape == (B3, lat3), out3.shape
    assert jnp.allclose(out3, ref3, atol=1e-4, rtol=1e-4), "mismatch (K-tiled case)"

    print("KERNEL_OK")
</pallas_src>

<mosaic_0001>
module attributes {stable_mosaic.version = 11 : i64} {
  func.func @_encoder_kernel_fused(%arg0: i32, %arg1: memref<8x128xf32, #tpu.memory_space<vmem>>, %arg2: memref<128x128xf32, #tpu.memory_space<vmem>>, %arg3: memref<1x128xf32, #tpu.memory_space<vmem>>, %arg4: memref<128x128xf32, #tpu.memory_space<vmem>>, %arg5: memref<1x128xf32, #tpu.memory_space<vmem>>, %arg6: memref<8x128xf32, #tpu.memory_space<vmem>>) attributes {dimension_semantics = [#tpu.dimension_semantics<parallel>], iteration_bounds = array<i64: 1>, scalar_prefetch = 0 : i64, scratch_operands = 0 : i64, tpu.core_type = #tpu.core_type<tc>, window_params = [{transform_indices = @transform_0, window_bounds = array<i64: 8, 128>}, {pipeline_mode = #tpu.pipeline_mode<synchronous>, transform_indices = @transform_1, window_bounds = array<i64: 128, 128>}, {pipeline_mode = #tpu.pipeline_mode<synchronous>, transform_indices = @transform_2, window_bounds = array<i64: 1, 128>}, {pipeline_mode = #tpu.pipeline_mode<synchronous>, transform_indices = @transform_3, window_bounds = array<i64: 128, 128>}, {pipeline_mode = #tpu.pipeline_mode<synchronous>, transform_indices = @transform_4, window_bounds = array<i64: 1, 128>}, {transform_indices = @transform_5, window_bounds = array<i64: 8, 128>}]} {
    %c0 = arith.constant 0 : index
    %c0_0 = arith.constant 0 : index
    %0 = vector.load %arg1[%c0, %c0_0] : memref<8x128xf32, #tpu.memory_space<vmem>>, vector<8x128xf32>
    %c0_1 = arith.constant 0 : index
    %c0_2 = arith.constant 0 : index
    %1 = vector.load %arg2[%c0_1, %c0_2] : memref<128x128xf32, #tpu.memory_space<vmem>>, vector<128x128xf32>
    %cst = arith.constant dense<0.000000e+00> : vector<8x128xf32>
    %2 = tpu.matmul %0, %1, %cst {dimension_numbers = #tpu.dot_dimension_numbers<[1], [0], [0], [1], [0, 0, 1, 1], [], []>} : vector<8x128xf32>, vector<128x128xf32>, vector<8x128xf32> -> vector<8x128xf32>
    %c0_3 = arith.constant 0 : index
    %c0_4 = arith.constant 0 : index
    %3 = vector.load %arg3[%c0_3, %c0_4] : memref<1x128xf32, #tpu.memory_space<vmem>>, vector<1x128xf32>
    %4 = vector.broadcast %3 : vector<1x128xf32> to vector<8x128xf32>
    %5 = arith.addf %2, %4 : vector<8x128xf32>
    %cst_5 = arith.constant 0.000000e+00 : f32
    %6 = vector.broadcast %cst_5 : f32 to vector<8x128xf32>
    %7 = arith.cmpf oge, %5, %6 : vector<8x128xf32>
    %cst_6 = arith.constant 2.000000e-01 : f32
    %8 = vector.broadcast %cst_6 : f32 to vector<8x128xf32>
    %9 = arith.mulf %8, %5 : vector<8x128xf32>
    %10 = arith.select %7, %5, %9 : vector<8x128xi1>, vector<8x128xf32>
    %c0_7 = arith.constant 0 : index
    %c0_8 = arith.constant 0 : index
    %11 = vector.load %arg4[%c0_7, %c0_8] : memref<128x128xf32, #tpu.memory_space<vmem>>, vector<128x128xf32>
    %cst_9 = arith.constant dense<0.000000e+00> : vector<8x128xf32>
    %12 = tpu.matmul %10, %11, %cst_9 {dimension_numbers = #tpu.dot_dimension_numbers<[1], [0], [0], [1], [0, 0, 1, 1], [], []>} : vector<8x128xf32>, vector<128x128xf32>, vector<8x128xf32> -> vector<8x128xf32>
    %c0_10 = arith.constant 0 : index
    %c0_11 = arith.constant 0 : index
    %13 = vector.load %arg5[%c0_10, %c0_11] : memref<1x128xf32, #tpu.memory_space<vmem>>, vector<1x128xf32>
    %14 = vector.broadcast %13 : vector<1x128xf32> to vector<8x128xf32>
    %15 = arith.addf %12, %14 : vector<8x128xf32>
    %c0_12 = arith.constant 0 : index
    %c0_13 = arith.constant 0 : index
    %16 = vector.load %arg6[%c0_12, %c0_13] : memref<8x128xf32, #tpu.memory_space<vmem>>, vector<8x128xf32>
    tpu.vector_store %arg6[%c0_12, %c0_13], %15 {strides = array<i32>} : memref<8x128xf32, #tpu.memory_space<vmem>>, vector<8x128xf32>,
    return
  }
  func.func @transform_0(%arg0: i32) -> (i32, i32) {
    %c0_i32 = arith.constant 0 : i32
    %c0_i32_0 = arith.constant 0 : i32
    return %arg0, %c0_i32 : i32, i32
  }
  func.func @transform_1(%arg0: i32) -> (i32, i32) {
    %c0_i32 = arith.constant 0 : i32
    %c0_i32_0 = arith.constant 0 : i32
    %c0_i32_1 = arith.constant 0 : i32
    return %c0_i32, %c0_i32_0 : i32, i32
  }
  func.func @transform_2(%arg0: i32) -> (i32, i32) {
    %c0_i32 = arith.constant 0 : i32
    %c0_i32_0 = arith.constant 0 : i32
    %c0_i32_1 = arith.constant 0 : i32
    return %c0_i32, %c0_i32_0 : i32, i32
  }
  func.func @transform_3(%arg0: i32) -> (i32, i32) {
    %c0_i32 = arith.constant 0 : i32
    %c0_i32_0 = arith.constant 0 : i32
    %c0_i32_1 = arith.constant 0 : i32
    return %c0_i32, %c0_i32_0 : i32, i32
  }
  func.func @transform_4(%arg0: i32) -> (i32, i32) {
    %c0_i32 = arith.constant 0 : i32
    %c0_i32_0 = arith.constant 0 : i32
    %c0_i32_1 = arith.constant 0 : i32
    return %c0_i32, %c0_i32_0 : i32, i32
  }
  func.func @transform_5(%arg0: i32) -> (i32, i32) {
    %c0_i32 = arith.constant 0 : i32
    %c0_i32_0 = arith.constant 0 : i32
    return %arg0, %c0_i32 : i32, i32
  }
}

</mosaic_0001>

<llo_original>
// kernel: tpu_custom_call.1
$region0: #{tpu_custom_call.1}
  #allocation0 [shape = 'u32[]', space=smem, size = 0x4, offset = 0x4, fixed_abs, tag = 'smem constant byte address 0x4 - core index']
  #allocation1 [shape = 'u32[72,128]{1,0:T(1,128)}', space=vmem, size = 0x9000, scoped, tag = 'internal scratch']
  %s0 = inlined_call_operand.hbm [shape: f32[8,128], index: 0, kind: input, shape index: {}]
  %s1 = inlined_call_operand.hbm [shape: f32[128,128], index: 1, kind: input, shape index: {}]
  %s2 = inlined_call_operand.vmem [shape: f32[1,128], index: 2, kind: input, shape index: {}]
  %s3 = inlined_call_operand.hbm [shape: f32[128,128], index: 3, kind: input, shape index: {}]
  %s4 = inlined_call_operand.vmem [shape: f32[1,128], index: 4, kind: input, shape index: {}]
  %s5 = inlined_call_operand.hbm [shape: f32[8,128], index: 5, kind: output, shape index: {}]
  %s6 = sld [smem:[#allocation0]]
  $region42: #{tpu_custom_call.1} parent=0
    _
  %s8 = ssub.s32 1, %s6
  %s9 = scalar_select 0, %s8, %s6
  $region1: #{tpu_custom_call.1} parent=0
    #allocation2 [shape = 'u8[4096]{0}', space=vmem, size = 0x1000, scoped, tag = 'input window, operand 0, single buffered']
    #allocation3 [shape = 's32[1]{0}', space=sflag, size = 0x4, scoped, tag = 'scoped memory for tpu_custom_call.1']
    #allocation4 [shape = 's32[1]{0}', space=sflag, size = 0x4, scoped, tag = 'scoped memory for tpu_custom_call.1']
    #allocation5 [shape = 'u8[65536]{0}', space=vmem, size = 0x10000, scoped, tag = 'input window, operand 1, single buffered']
    #allocation6 [shape = 's32[1]{0}', space=sflag, size = 0x4, scoped, tag = 'scoped memory for tpu_custom_call.1']
    #allocation7 [shape = 'u8[65536]{0}', space=vmem, size = 0x10000, scoped, tag = 'input window, operand 3, single buffered']
    #allocation8 [shape = 'u8[4096]{0}', space=vmem, size = 0x1000, scoped, tag = 'output window, operand 0, single buffered']
    %10 = vsyncpa [#allocation3], 0
    %11 = vsyncpa [#allocation6], 0
    %12 = vsyncpa [#allocation4], 0
    // Predicated region
    $region2: #{tpu_custom_call.1} parent=1 // pred_check
      _
    $region3: #{tpu_custom_call.1} parent=1 // pred_check_branch
      %14 = sbr.rel (0) target = $region5
    $region4: #{tpu_custom_call.1} parent=1 // pred_region
      %16 = vsyncadd [#allocation3], 0
      %s18 = sshll.u32 %s0, 4
      %s19 = int_to_ptr.hbm [resolvable:$true] %s18
      %s20 = sshll.u32 [#allocation2], 4
      %s21 = int_to_ptr.vmem [resolvable:$true] %s20
      %23 = dma.hbm_to_vmem [thread:$0]  %s19, 128, %s21, [#allocation3]
    $region5: #{tpu_custom_call.1} parent=1 // pred_fallthru
      _
    // Predicated region
    $region6: #{tpu_custom_call.1} parent=1 // pred_check
      _
    $region7: #{tpu_custom_call.1} parent=1 // pred_check_branch
      %25 = sbr.rel (0) target = $region9
    $region8: #{tpu_custom_call.1} parent=1 // pred_region
      %27 = vsyncadd [#allocation6], 0
      %s28 = sshll.u32 %s1, 4
      %s29 = int_to_ptr.hbm [resolvable:$true] %s28
      %s30 = sshll.u32 [#allocation5], 4
      %s31 = int_to_ptr.vmem [resolvable:$true] %s30
      %36 = dma.hbm_to_vmem [thread:$0]  %s29, 2048, %s31, [#allocation6], 128, 128, 8
    $region9: #{tpu_custom_call.1} parent=1 // pred_fallthru
      _
    // Predicated region
    $region10: #{tpu_custom_call.1} parent=1 // pred_check
      _
    $region11: #{tpu_custom_call.1} parent=1 // pred_check_branch
      %38 = sbr.rel (0) target = $region13
    $region12: #{tpu_custom_call.1} parent=1 // pred_region
      _
    $region13: #{tpu_custom_call.1} parent=1 // pred_fallthru
      _
    // Predicated region
    $region14: #{tpu_custom_call.1} parent=1 // pred_check
      _
    $region15: #{tpu_custom_call.1} parent=1 // pred_check_branch
      %40 = sbr.rel (0) target = $region17
    $region16: #{tpu_custom_call.1} parent=1 // pred_region
      %42 = vsyncadd [#allocation6], 0
      %s43 = sshll.u32 %s3, 4
      %s44 = int_to_ptr.hbm [resolvable:$true] %s43
      %s45 = sshll.u32 [#allocation7], 4
      %s46 = int_to_ptr.vmem [resolvable:$true] %s45
      %51 = dma.hbm_to_vmem [thread:$0]  %s44, 2048, %s46, [#allocation6], 128, 128, 8
    $region17: #{tpu_custom_call.1} parent=1 // pred_fallthru
      _
    // Predicated region
    $region18: #{tpu_custom_call.1} parent=1 // pred_check
      _
    $region19: #{tpu_custom_call.1} parent=1 // pred_check_branch
      %53 = sbr.rel (0) target = $region21
    $region20: #{tpu_custom_call.1} parent=1 // pred_region
      _
    $region21: #{tpu_custom_call.1} parent=1 // pred_fallthru
      _
    // Predicated region
    $region22: #{tpu_custom_call.1} parent=1 // pred_check
      _
    $region23: #{tpu_custom_call.1} parent=1 // pred_check_branch
      %55 = sbr.rel (0) target = $region25
    $region24: #{tpu_custom_call.1} parent=1 // pred_region
      %57 = dma.done [#allocation3], 128
    $region25: #{tpu_custom_call.1} parent=1 // pred_fallthru
      _
    // Predicated region
    $region26: #{tpu_custom_call.1} parent=1 // pred_check
      _
    $region27: #{tpu_custom_call.1} parent=1 // pred_check_branch
      %59 = sbr.rel (0) target = $region29
    $region28: #{tpu_custom_call.1} parent=1 // pred_region
      %61 = dma.done [#allocation6], 2048
    $region29: #{tpu_custom_call.1} parent=1 // pred_fallthru
      _
    // Predicated region
    $region30: #{tpu_custom_call.1} parent=1 // pred_check
      _
    $region31: #{tpu_custom_call.1} parent=1 // pred_check_branch
      %63 = sbr.rel (0) target = $region33
    $region32: #{tpu_custom_call.1} parent=1 // pred_region
      %65 = dma.done [#allocation6], 2048
    $region33: #{tpu_custom_call.1} parent=1 // pred_fallthru
      _
    %v66 = vld [vmem:[#allocation2] sm:$0xff]
    %v67 = vld [vmem:[#allocation5] sm:$0xff]
    %v68 = vld [vmem:[#allocation5 + $0x8] sm:$0xff]
    %v69 = vld [vmem:[#allocation5 + $0x10] sm:$0xff]
    %v70 = vld [vmem:[#allocation5 + $0x18] sm:$0xff]
    %v71 = vld [vmem:[#allocation5 + $0x20] sm:$0xff]
    %v72 = vld [vmem:[#allocation5 + $0x28] sm:$0xff]
    %v73 = vld [vmem:[#allocation5 + $0x30] sm:$0xff]
    %v74 = vld [vmem:[#allocation5 + $0x38] sm:$0xff]
    %v75 = vld [vmem:[#allocation5 + $0x40] sm:$0xff]
    %v76 = vld [vmem:[#allocation5 + $0x48] sm:$0xff]
    %v77 = vld [vmem:[#allocation5 + $0x50] sm:$0xff]
    %v78 = vld [vmem:[#allocation5 + $0x58] sm:$0xff]
    %v79 = vld [vmem:[#allocation5 + $0x60] sm:$0xff]
    %v80 = vld [vmem:[#allocation5 + $0x68] sm:$0xff]
    %v81 = vld [vmem:[#allocation5 + $0x70] sm:$0xff]
    %v82 = vld [vmem:[#allocation5 + $0x78] sm:$0xff]
    %v83 = vld [vmem:[%s2] sm:$0x1]
    %v85 = vperm.slane %v83, 0
    %87 = vmatpush.msra.mxu0 %v82
    %88 = vmatpush.msra.mxu0 %v81
    %89 = vmatpush.msra.mxu0 %v80
    %90 = vmatpush.msra.mxu0 %v79
    %91 = vmatpush.msra.mxu0 %v78
    %92 = vmatpush.msra.mxu0 %v77
    %93 = vmatpush.msra.mxu0 %v76
    %94 = vmatpush.msra.mxu0 %v75
    %95 = vmatpush.msra.mxu0 %v74
    %96 = vmatpush.msra.mxu0 %v73
    %97 = vmatpush.msra.mxu0 %v72
    %98 = vmatpush.msra.mxu0 %v71
    %99 = vmatpush.msra.mxu0 %v70
    %100 = vmatpush.msra.mxu0 %v69
    %101 = vmatpush.msra.mxu0 %v68
    %102 = vmatpush.msra.mxu0 %v67
    %103 = vmatmul.f32.gmra.mxu0 %v66
    %v104 = vpop.f32.mrf.mxu0
    %v105 = vadd.f32 %v85, %v104
    %106 = vdwg.mxu0
    %vm107 = vcmp.ge.f32.partialorder %v105, 0.0
    %v108 = vmul.f32 %v105, 0.2
    %v109 = vsel %vm107, %v105, %v108
    %v110 = vld [vmem:[#allocation7] sm:$0xff]
    %v111 = vld [vmem:[#allocation7 + $0x8] sm:$0xff]
    %v112 = vld [vmem:[#allocation7 + $0x10] sm:$0xff]
    %v113 = vld [vmem:[#allocation7 + $0x18] sm:$0xff]
    %v114 = vld [vmem:[#allocation7 + $0x20] sm:$0xff]
    %v115 = vld [vmem:[#allocation7 + $0x28] sm:$0xff]
    %v116 = vld [vmem:[#allocation7 + $0x30] sm:$0xff]
    %v117 = vld [vmem:[#allocation7 + $0x38] sm:$0xff]
    %v118 = vld [vmem:[#allocation7 + $0x40] sm:$0xff]
    %v119 = vld [vmem:[#allocation7 + $0x48] sm:$0xff]
    %v120 = vld [vmem:[#allocation7 + $0x50] sm:$0xff]
    %v121 = vld [vmem:[#allocation7 + $0x58] sm:$0xff]
    %v122 = vld [vmem:[#allocation7 + $0x60] sm:$0xff]
    %v123 = vld [vmem:[#allocation7 + $0x68] sm:$0xff]
    %v124 = vld [vmem:[#allocation7 + $0x70] sm:$0xff]
    %v125 = vld [vmem:[#allocation7 + $0x78] sm:$0xff]
    %v126 = vld [vmem:[%s4] sm:$0x1]
    %v128 = vperm.slane %v126, 0
    %130 = vmatpush.msra.mxu0 %v125
    %131 = vmatpush.msra.mxu0 %v124
    %132 = vmatpush.msra.mxu0 %v123
    %133 = vmatpush.msra.mxu0 %v122
    %134 = vmatpush.msra.mxu0 %v121
    %135 = vmatpush.msra.mxu0 %v120
    %136 = vmatpush.msra.mxu0 %v119
    %137 = vmatpush.msra.mxu0 %v118
    %138 = vmatpush.msra.mxu0 %v117
    %139 = vmatpush.msra.mxu0 %v116
    %140 = vmatpush.msra.mxu0 %v115
    %141 = vmatpush.msra.mxu0 %v114
    %142 = vmatpush.msra.mxu0 %v113
    %143 = vmatpush.msra.mxu0 %v112
    %144 = vmatpush.msra.mxu0 %v111
    %145 = vmatpush.msra.mxu0 %v110
    %146 = vmatmul.f32.gmra.mxu0 %v109
    %v147 = vpop.f32.mrf.mxu0
    %v148 = vadd.f32 %v128, %v147
    %149 = vdwg.mxu0
    %150 = vst [vmem:[#allocation8] sm:$0xff] %v148
    // Predicated region
    $region34: #{tpu_custom_call.1} parent=1 // pred_check
      _
    $region35: #{tpu_custom_call.1} parent=1 // pred_check_branch
      %152 = sbr.rel (0) target = $region37
    $region36: #{tpu_custom_call.1} parent=1 // pred_region
      %154 = vsyncadd [#allocation4], 0
      %s156 = sshll.u32 [#allocation8], 4
      %s157 = int_to_ptr.vmem [resolvable:$true] %s156
      %s158 = sshll.u32 %s5, 4
      %s159 = int_to_ptr.hbm [resolvable:$true] %s158
      %161 = dma.vmem_to_hbm [thread:$0]  %s157, 128, %s159, [#allocation4]
    $region37: #{tpu_custom_call.1} parent=1 // pred_fallthru
      _
    // Predicated region
    $region38: #{tpu_custom_call.1} parent=1 // pred_check
      _
    $region39: #{tpu_custom_call.1} parent=1 // pred_check_branch
      %163 = sbr.rel (0) target = $region41
    $region40: #{tpu_custom_call.1} parent=1 // pred_region
      %165 = dma.done [#allocation4], 128
    $region41: #{tpu_custom_call.1} parent=1 // pred_fallthru
      _
    %166 = vsyncpa [#allocation3], 1
    %167 = vsyncpa [#allocation6], 1
    %168 = vsyncpa [#allocation4], 1

</llo_original>
